<compile_context>
chip_gen: v7x
topology: tpu7x:2x2x1
jax: 0.10.0
libtpu: 0.0.40
codegen_flags: <defaults>
</compile_context>

<pallas_src>
import functools

import jax
import jax.numpy as jnp
from jax.experimental import pallas as pl
from jax.experimental.pallas import tpu as pltpu


# ----------------------------------------------------------------------------- kernel
def _deup_cat_kernel(x_ref, prev_ref, wx_ref, wp_ref, b_ref, o_ref):
    """One (n, d) slab of input voxels, one (kd, kh) output tap-pair.

    x_ref:    (H*W, Cin)    input voxels of this (n, d) slab
    prev_ref: (H, W, 2*Co)  prev rows for this (kd, kh); lanes = (kw, c)
    wx_ref:   (Cin, 2*Co)   folded conv1 -> convT2 -> conv3[y-half] for this (kd, kh)
    wp_ref:   (2*Co, 2*Co)  blockdiag(W3p, 2): conv3[prev-half] per kw slot
    b_ref:    (1, 2*Co)     fused bias for this (kd, kh)  (f32)
    o_ref:    (H, W, 2*Co)  output rows for this (kd, kh); lanes = (kw, c)
    """
    H, W, L = o_ref.shape
    # y-path: conv1 -> convT2 -> conv3[y half], folded into a single matmul.
    acc = jnp.dot(x_ref[...], wx_ref[...], preferred_element_type=jnp.float32)
    # prev-path: one blockdiag-of-2 matmul (2 kw taps packed -> 2Co-wide MXU feed).
    acc = acc + jnp.dot(prev_ref[...].reshape(H * W, L), wp_ref[...],
                        preferred_element_type=jnp.float32)
    acc = acc + b_ref[...]
    o_ref[...] = acc.reshape(H, W, L).astype(o_ref.dtype)


# ----------------------------------------------------------------------------- weight folding
def fold_deup_cat_params(params, compute_dtype=jnp.bfloat16):
    """Fold conv1 -> convT2 -> conv3 into per-(kd, kh) weights.

    Call ONCE (eagerly, outside jit) and pass the result to the forward
    functions, so the folding einsums are not re-traced/re-run per call.
    """
    conv1_w = jnp.asarray(params["conv1_w"], jnp.float32)   # (Co, Cin, 1, 1, 1)
    conv1_b = jnp.asarray(params["conv1_b"], jnp.float32)   # (Co,)
    conv2_w = jnp.asarray(params["conv2_w"], jnp.float32)   # (Co, Co, 2, 2, 2)
    conv2_b = jnp.asarray(params["conv2_b"], jnp.float32)   # (Co,)
    conv3_w = jnp.asarray(params["conv3_w"], jnp.float32)   # (Co, 2Co, 1, 1, 1)
    conv3_b = jnp.asarray(params["conv3_b"], jnp.float32)   # (Co,)
    Co, Cin = conv1_w.shape[0], conv1_w.shape[1]

    W1 = conv1_w.reshape(Co, Cin).T                          # (Cin, Co)
    # ConvTranspose3d weight layout: (Cin=Co, Cout=Co, kd, kh, kw); tap t = kd*4+kh*2+kw.
    W2t = conv2_w.transpose(2, 3, 4, 0, 1).reshape(8, Co, Co)
    W3 = conv3_w.reshape(Co, 2 * Co).T                       # (2Co, Co)
    W3p, W3y = W3[:Co], W3[Co:]                              # prev half / y half

    # y-path fold: out_tap = x @ (W1 @ W2_t @ W3y)
    Wc = jnp.einsum("ci,tio,od->ctd", W1, W2t, W3y)          # (Cin, 8, Co)
    wx = Wc.reshape(Cin, 4, 2 * Co).transpose(1, 0, 2)       # (4=(kd,kh), Cin, 2Co=(kw,c))

    # fused bias per tap: (b1 @ W2_t + b2) @ W3y + b3
    bc = (jnp.einsum("i,tio->to", conv1_b, W2t) + conv2_b[None, :]) @ W3y + conv3_b[None, :]
    bias = bc.reshape(4, 1, 2 * Co)                          # f32, added post-accumulation

    # prev-path: conv3 prev-half applied to each kw slot -> blockdiag of 2.
    wp = jnp.kron(jnp.eye(2, dtype=jnp.float32), W3p)        # (2Co, 2Co)

    return {"wx": wx.astype(compute_dtype),
            "wp": wp.astype(compute_dtype),
            "bias": bias}


# ----------------------------------------------------------------------------- fused op (channels-last)
def deup_cat_channels_last(x_cl, prev_cl, folded, *, out_dtype=None):
    """x_cl: (N, D, H, W, Cin), prev_cl: (N, 2D, 2H, 2W, Co) -> (N, 2D, 2H, 2W, Co).

    No layout transposes: prev and out are addressed in their natural
    channels-last interleaved layout through pure reshapes + BlockSpec index
    maps over the (n*d, kd, kh) grid.
    """
    N, D, H, W, Cin = x_cl.shape
    wx, wp, bias = folded["wx"], folded["wp"], folded["bias"]
    compute_dtype = wx.dtype
    L = wp.shape[0]
    Co = L // 2
    out_dtype = compute_dtype if out_dtype is None else out_dtype
    assert wx.shape == (4, Cin, L), (wx.shape, Cin, L)
    assert prev_cl.shape == (N, 2 * D, 2 * H, 2 * W, Co), prev_cl.shape

    ND, HW = N * D, H * W
    # Pure reshapes (no data movement): rows = (n, d | kd, h, kh, w), lanes = (kw, c).
    x_r = x_cl.reshape(ND, HW, Cin).astype(compute_dtype)
    prev_r = prev_cl.reshape(ND, 2, H, 2, W, L).astype(compute_dtype)

    # VMEM budget sized from the actual blocks (x2 double-buffering + headroom),
    # capped well below v7x's 64 MiB per-TC VMEM.
    item_c = jnp.dtype(compute_dtype).itemsize
    item_o = jnp.dtype(out_dtype).itemsize
    block_bytes = (HW * Cin * item_c          # x slab
                   + HW * L * item_c          # prev block
                   + HW * L * item_o          # out block
                   + Cin * L * item_c         # wx
                   + L * L * item_c           # wp
                   + L * 4)                   # bias
    vmem_limit = int(min(48 * 2**20, max(4 * 2**20, 3 * block_bytes)))

    out_r = pl.pallas_call(
        _deup_cat_kernel,
        out_shape=jax.ShapeDtypeStruct((ND, 2, H, 2, W, L), out_dtype),
        grid=(ND, 2, 2),                                    # (n*d, kd, kh): 4*N*D steps (even)
        in_specs=[
            # x slab: constant over (kd, kh) -> DMA'd once per nd (block index unchanged).
            pl.BlockSpec((None, HW, Cin), lambda nd, kd, kh: (nd, 0, 0)),
            # prev rows for this (kd, kh) in the interleaved layout (strided DMA, no regroup pass).
            pl.BlockSpec((None, None, H, None, W, L),
                         lambda nd, kd, kh: (nd, kd, 0, kh, 0, 0)),
            # folded y-path weight slice for this (kd, kh).
            pl.BlockSpec((None, Cin, L), lambda nd, kd, kh: (kd * 2 + kh, 0, 0)),
            # prev-path blockdiag(W3p, 2): constant across the grid.
            pl.BlockSpec((L, L), lambda nd, kd, kh: (0, 0)),
            # fused bias for this (kd, kh).
            pl.BlockSpec((None, 1, L), lambda nd, kd, kh: (kd * 2 + kh, 0, 0)),
        ],
        out_specs=pl.BlockSpec((None, None, H, None, W, L),
                               lambda nd, kd, kh: (nd, kd, 0, kh, 0, 0)),
        compiler_params=pltpu.CompilerParams(
            dimension_semantics=("parallel", "parallel", "parallel"),
            vmem_limit_bytes=vmem_limit),
    )(x_r, prev_r, wx, wp, bias)

    # Pure reshape back to channels-last (N, 2D, 2H, 2W, Co).
    return out_r.reshape(N, 2 * D, 2 * H, 2 * W, Co)


# ----------------------------------------------------------------------------- NCDHW wrapper (PyTorch contract)
def deup_cat_forward(x_ncdhw, prev_ncdhw, folded, *, out_dtype=None):
    """x: (N, Cin, D, H, W), prev: (N, Co, 2D, 2H, 2W) -> (N, Co, 2D, 2H, 2W).

    Only the NCDHW<->NDHWC transposes required by the external contract remain
    (one pass over x, one over prev, one over out).  A channels-last pipeline
    should call deup_cat_channels_last directly and skip them.
    """
    x_cl = jnp.transpose(x_ncdhw, (0, 2, 3, 4, 1))        # (N, D, H, W, Cin)
    prev_cl = jnp.transpose(prev_ncdhw, (0, 2, 3, 4, 1))  # (N, 2D, 2H, 2W, Co)
    out_cl = deup_cat_channels_last(x_cl, prev_cl, folded, out_dtype=out_dtype)
    return jnp.transpose(out_cl, (0, 4, 1, 2, 3))         # NCDHW


# ----------------------------------------------------------------------------- pure-JAX reference
def _reference(x_ncdhw, prev_ncdhw, params):
    """Pure-JAX reference of the PyTorch forward (channels-last math)."""
    conv1_w, conv1_b = params["conv1_w"], params["conv1_b"]
    conv2_w, conv2_b = params["conv2_w"], params["conv2_b"]
    conv3_w, conv3_b = params["conv3_w"], params["conv3_b"]
    N, Cin, D, H, W = x_ncdhw.shape
    Co = conv1_w.shape[0]

    x_nl = x_ncdhw.transpose(0, 2, 3, 4, 1)                          # (N,D,H,W,Cin)
    W1 = conv1_w.reshape(Co, Cin).T
    x1 = x_nl @ W1 + conv1_b                                         # (N,D,H,W,Co)

    W2s = conv2_w.transpose(0, 2, 3, 4, 1)                           # (Ci,2,2,2,Co)
    y8 = jnp.einsum("ndhwc,cijko->ndhwijko", x1, W2s) + conv2_b      # (N,D,H,W,2,2,2,Co)
    y = (y8.transpose(0, 1, 4, 2, 5, 3, 6, 7)
         .reshape(N, 2 * D, 2 * H, 2 * W, Co))

    prev_nl = prev_ncdhw.transpose(0, 2, 3, 4, 1)
    cat = jnp.concatenate([prev_nl, y], axis=-1)                     # (N,2D,2H,2W,2Co)
    W3 = conv3_w.reshape(Co, 2 * Co).T
    out = cat @ W3 + conv3_b
    return out.transpose(0, 4, 1, 2, 3)                              # NCDHW


if __name__ == "__main__":
    key = jax.random.PRNGKey(0)
    # Small but layout-friendly shapes consistent with a TransBTS decoder stage.
    in_channels, out_channels = 32, 64
    N, D, H, W = 2, 4, 8, 16

    ks = jax.random.split(key, 8)
    params = {
        "conv1_w": jax.random.uniform(ks[0], (out_channels, in_channels, 1, 1, 1),
                                      jnp.float32, -0.1, 0.1),
        "conv1_b": jax.random.uniform(ks[1], (out_channels,), jnp.float32, -0.1, 0.1),
        "conv2_w": jax.random.uniform(ks[2], (out_channels, out_channels, 2, 2, 2),
                                      jnp.float32, -0.1, 0.1),
        "conv2_b": jax.random.uniform(ks[3], (out_channels,), jnp.float32, -0.1, 0.1),
        "conv3_w": jax.random.uniform(ks[4], (out_channels, 2 * out_channels, 1, 1, 1),
                                      jnp.float32, -0.1, 0.1),
        "conv3_b": jax.random.uniform(ks[5], (out_channels,), jnp.float32, -0.1, 0.1),
    }
    x = jax.random.normal(ks[6], (N, in_channels, D, H, W), jnp.float32)
    prev = jax.random.normal(ks[7], (N, out_channels, 2 * D, 2 * H, 2 * W), jnp.float32)

    ref = jax.block_until_ready(_reference(x, prev, params))

    # Default path: bf16 data movement + bf16 output, f32 MXU accumulation.
    folded_bf16 = fold_deup_cat_params(params, jnp.bfloat16)   # folded once, outside jit
    fwd = jax.jit(deup_cat_forward)
    out = jax.block_until_ready(fwd(x, prev, folded_bf16))
    assert out.shape == (N, out_channels, 2 * D, 2 * H, 2 * W), out.shape
    assert jnp.allclose(out.astype(jnp.float32), ref, atol=5e-2, rtol=5e-2), \
        float(jnp.abs(out.astype(jnp.float32) - ref).max())

    # Full-f32 path with the same folded math: tight tolerance against the reference.
    folded_f32 = fold_deup_cat_params(params, jnp.float32)
    out32 = jax.block_until_ready(fwd(x, prev, folded_f32))
    assert out32.dtype == jnp.float32
    assert jnp.allclose(out32, ref, atol=1e-4, rtol=1e-4), float(jnp.abs(out32 - ref).max())

    print("KERNEL_OK")
</pallas_src>

<mosaic_0001>
module attributes {stable_mosaic.version = 11 : i64} {
  func.func @_deup_cat_kernel(%arg0: i32, %arg1: i32, %arg2: i32, %arg3: memref<1x128x32xbf16, #tpu.memory_space<vmem>>, %arg4: memref<1x1x8x1x16x128xbf16, #tpu.memory_space<vmem>>, %arg5: memref<1x32x128xbf16, #tpu.memory_space<vmem>>, %arg6: memref<128x128xbf16, #tpu.memory_space<vmem>>, %arg7: memref<1x1x128xf32, #tpu.memory_space<vmem>>, %arg8: memref<1x1x8x1x16x128xbf16, #tpu.memory_space<vmem>>) attributes {dimension_semantics = [#tpu.dimension_semantics<parallel>, #tpu.dimension_semantics<parallel>, #tpu.dimension_semantics<parallel>], iteration_bounds = array<i64: 8, 2, 2>, scalar_prefetch = 0 : i64, scratch_operands = 0 : i64, tpu.core_type = #tpu.core_type<tc>, window_params = [{transform_indices = @transform_0, window_bounds = array<i64: 1, 128, 32>}, {transform_indices = @transform_1, window_bounds = array<i64: 1, 1, 8, 1, 16, 128>}, {transform_indices = @transform_2, window_bounds = array<i64: 1, 32, 128>}, {pipeline_mode = #tpu.pipeline_mode<synchronous>, transform_indices = @transform_3, window_bounds = array<i64: 128, 128>}, {transform_indices = @transform_4, window_bounds = array<i64: 1, 1, 128>}, {transform_indices = @transform_5, window_bounds = array<i64: 1, 1, 8, 1, 16, 128>}]} {
    %c0 = arith.constant 0 : index
    %c0_0 = arith.constant 0 : index
    %c0_1 = arith.constant 0 : index
    %0 = vector.load %arg3[%c0, %c0_0, %c0_1] : memref<1x128x32xbf16, #tpu.memory_space<vmem>>, vector<1x128x32xbf16>
    %1 = vector.shape_cast %0 : vector<1x128x32xbf16> to vector<128x32xbf16>
    %c0_2 = arith.constant 0 : index
    %c0_3 = arith.constant 0 : index
    %c0_4 = arith.constant 0 : index
    %2 = vector.load %arg5[%c0_2, %c0_3, %c0_4] : memref<1x32x128xbf16, #tpu.memory_space<vmem>>, vector<1x32x128xbf16>
    %3 = vector.shape_cast %2 : vector<1x32x128xbf16> to vector<32x128xbf16>
    %cst = arith.constant dense<0.000000e+00> : vector<128x128xf32>
    %4 = tpu.matmul %1, %3, %cst {dimension_numbers = #tpu.dot_dimension_numbers<[1], [0], [0], [1], [0, 0, 1, 1], [], []>} : vector<128x32xbf16>, vector<32x128xbf16>, vector<128x128xf32> -> vector<128x128xf32>
    %c0_5 = arith.constant 0 : index
    %c0_6 = arith.constant 0 : index
    %c0_7 = arith.constant 0 : index
    %c0_8 = arith.constant 0 : index
    %c0_9 = arith.constant 0 : index
    %c0_10 = arith.constant 0 : index
    %5 = vector.load %arg4[%c0_5, %c0_6, %c0_7, %c0_8, %c0_9, %c0_10] : memref<1x1x8x1x16x128xbf16, #tpu.memory_space<vmem>>, vector<1x1x8x1x16x128xbf16>
    %6 = vector.shape_cast %5 : vector<1x1x8x1x16x128xbf16> to vector<8x16x128xbf16>
    %7 = vector.shape_cast %6 : vector<8x16x128xbf16> to vector<128x128xbf16>
    %c0_11 = arith.constant 0 : index
    %c0_12 = arith.constant 0 : index
    %8 = vector.load %arg6[%c0_11, %c0_12] : memref<128x128xbf16, #tpu.memory_space<vmem>>, vector<128x128xbf16>
    %cst_13 = arith.constant dense<0.000000e+00> : vector<128x128xf32>
    %9 = tpu.matmul %7, %8, %cst_13 {dimension_numbers = #tpu.dot_dimension_numbers<[1], [0], [0], [1], [0, 0, 1, 1], [], []>} : vector<128x128xbf16>, vector<128x128xbf16>, vector<128x128xf32> -> vector<128x128xf32>
    %10 = arith.addf %4, %9 : vector<128x128xf32>
    %c0_14 = arith.constant 0 : index
    %c0_15 = arith.constant 0 : index
    %c0_16 = arith.constant 0 : index
    %11 = vector.load %arg7[%c0_14, %c0_15, %c0_16] : memref<1x1x128xf32, #tpu.memory_space<vmem>>, vector<1x1x128xf32>
    %12 = vector.shape_cast %11 : vector<1x1x128xf32> to vector<1x128xf32>
    %13 = vector.broadcast %12 : vector<1x128xf32> to vector<128x128xf32>
    %14 = arith.addf %10, %13 : vector<128x128xf32>
    %15 = vector.shape_cast %14 : vector<128x128xf32> to vector<8x16x128xf32>
    %16 = arith.truncf %15 : vector<8x16x128xf32> to vector<8x16x128xbf16>
    %c0_17 = arith.constant 0 : index
    %c0_18 = arith.constant 0 : index
    %c0_19 = arith.constant 0 : index
    %c0_20 = arith.constant 0 : index
    %c0_21 = arith.constant 0 : index
    %c0_22 = arith.constant 0 : index
    %17 = vector.load %arg8[%c0_17, %c0_18, %c0_19, %c0_20, %c0_21, %c0_22] : memref<1x1x8x1x16x128xbf16, #tpu.memory_space<vmem>>, vector<1x1x8x1x16x128xbf16>
    %18 = vector.shape_cast %17 : vector<1x1x8x1x16x128xbf16> to vector<8x16x128xbf16>
    %19 = vector.shape_cast %16 : vector<8x16x128xbf16> to vector<1x1x8x1x16x128xbf16>
    tpu.vector_store %arg8[%c0_17, %c0_18, %c0_19, %c0_20, %c0_21, %c0_22], %19 {strides = array<i32>} : memref<1x1x8x1x16x128xbf16, #tpu.memory_space<vmem>>, vector<1x1x8x1x16x128xbf16>,
    return
  }
  func.func @transform_0(%arg0: i32, %arg1: i32, %arg2: i32) -> (i32, i32, i32) {
    %c0_i32 = arith.constant 0 : i32
    %c0_i32_0 = arith.constant 0 : i32
    %c0_i32_1 = arith.constant 0 : i32
    return %arg0, %c0_i32, %c0_i32_0 : i32, i32, i32
  }
  func.func @transform_1(%arg0: i32, %arg1: i32, %arg2: i32) -> (i32, i32, i32, i32, i32, i32) {
    %c0_i32 = arith.constant 0 : i32
    %c0_i32_0 = arith.constant 0 : i32
    %c0_i32_1 = arith.constant 0 : i32
    %c0_i32_2 = arith.constant 0 : i32
    return %arg0, %arg1, %c0_i32, %arg2, %c0_i32_0, %c0_i32_1 : i32, i32, i32, i32, i32, i32
  }
  func.func @transform_2(%arg0: i32, %arg1: i32, %arg2: i32) -> (i32, i32, i32) {
    %c2_i32 = arith.constant 2 : i32
    %0 = arith.muli %arg1, %c2_i32 : i32
    %1 = arith.addi %0, %arg2 : i32
    %c0_i32 = arith.constant 0 : i32
    %c0_i32_0 = arith.constant 0 : i32
    %c0_i32_1 = arith.constant 0 : i32
    return %1, %c0_i32, %c0_i32_0 : i32, i32, i32
  }
  func.func @transform_3(%arg0: i32, %arg1: i32, %arg2: i32) -> (i32, i32) {
    %c0_i32 = arith.constant 0 : i32
    %c0_i32_0 = arith.constant 0 : i32
    %c0_i32_1 = arith.constant 0 : i32
    return %c0_i32, %c0_i32_0 : i32, i32
  }
  func.func @transform_4(%arg0: i32, %arg1: i32, %arg2: i32) -> (i32, i32, i32) {
    %c2_i32 = arith.constant 2 : i32
    %0 = arith.muli %arg1, %c2_i32 : i32
    %1 = arith.addi %0, %arg2 : i32
    %c0_i32 = arith.constant 0 : i32
    %c0_i32_0 = arith.constant 0 : i32
    %c0_i32_1 = arith.constant 0 : i32
    return %1, %c0_i32, %c0_i32_0 : i32, i32, i32
  }
  func.func @transform_5(%arg0: i32, %arg1: i32, %arg2: i32) -> (i32, i32, i32, i32, i32, i32) {
    %c0_i32 = arith.constant 0 : i32
    %c0_i32_0 = arith.constant 0 : i32
    %c0_i32_1 = arith.constant 0 : i32
    %c0_i32_2 = arith.constant 0 : i32
    return %arg0, %arg1, %c0_i32, %arg2, %c0_i32_0, %c0_i32_1 : i32, i32, i32, i32, i32, i32
  }
}

</mosaic_0001>

<llo_original>
// kernel: deup_cat_forward.1
$region0: #{deup_cat_forward.1}
  #allocation0 [shape = 'u32[]', space=smem, size = 0x4, offset = 0x4, fixed_abs, tag = 'smem constant byte address 0x4 - core index']
  #allocation1 [shape = 'u32[144,128]{1,0:T(1,128)}', space=vmem, size = 0x12000, scoped, tag = 'internal scratch']
  %s0 = inlined_call_operand.vmem [shape: bf16[8,128,32], index: 0, kind: input, shape index: {}]
  %s1 = inlined_call_operand.vmem [shape: bf16[8,2,8,2,16,128], index: 1, kind: input, shape index: {}]
  %s2 = inlined_call_operand.vmem [shape: bf16[4,32,128], index: 2, kind: input, shape index: {}]
  %s3 = inlined_call_operand.vmem [shape: bf16[128,128], index: 3, kind: input, shape index: {}]
  %s4 = inlined_call_operand.vmem [shape: f32[4,1,128], index: 4, kind: input, shape index: {}]
  %s5 = inlined_call_operand.vmem [shape: bf16[8,2,8,2,16,128], index: 5, kind: output, shape index: {}]
  %s6 = sld [smem:[#allocation0]]
  $region131: #{deup_cat_forward.1} parent=0
    _
  %s8 = ssub.s32 1, %s6
  %s9 = scalar_select 0, %s8, %s6
  $region1: #{deup_cat_forward.1} parent=0
    #allocation2 [shape = 'u8[65536]{0}', space=vmem, size = 0x10000, scoped, tag = 'input window, operand 1']
    #allocation3 [shape = 'u8[65536]{0}', space=vmem, size = 0x10000, scoped, tag = 'output window, operand 0']
    loop: start=0, step=1, limit=34
    $region2: #{deup_cat_forward.1} parent=1 // loop_pre_header
      _
    $region3: #{deup_cat_forward.1} parent=1 // loop_header
      %s11 = sphi 0, %s15
      %p12 = scmp.ge.s32.totalorder %s11, 34
      %s18 = sphi 0, %s37
      %s19 = sphi 0, %s33
      %s20 = sphi 0, %s29
      %s21 = sphi 0, %s18
      %s22 = sphi 0, %s19
      %s23 = sphi 0, %s20
      %s24 = sphi 0, %s21
      %s25 = sphi 0, %s22
      %s26 = sphi 0, %s23
      %s40 = sphi 0, %s42
      %s43 = sphi 0, %s40
      %s44 = sphi 0, %s43
      %s60 = sphi 0, %s44
      %s70 = sphi 0, %s72
      %s73 = sphi 0, %s70
      %s74 = sphi 0, %s73
      %s90 = sphi 0, %s74
      %s100 = sphi 0, %s102
      %s103 = sphi 0, %s100
      %s104 = sphi 0, %s103
      %s120 = sphi 0, %s104
      %s124 = sphi 0, %s124
      %s126 = sphi 0, %s124
      %s127 = sphi 0, %s126
      %s141 = sphi 0, %s127
      %s151 = sphi 0, %s153
      %s154 = sphi 0, %s151
      %s155 = sphi 0, %s154
      %s171 = sphi 0, %s155
      %s181 = sphi 0, %s183
      %s184 = sphi 0, %s181
      %s185 = sphi 0, %s184
      %s201 = sphi 0, %s185
    $region4: #{deup_cat_forward.1} parent=1 // loop_header_branch
      %14 = sbr.rel (%p12) target = $region8
    $region5: #{deup_cat_forward.1} parent=1 // loop_body
      %s16 = ssub.s32 %s11, 1
      %s17 = ssub.s32 %s11, 2
      %s27 = sadd.s32 1, %s20
      %p28 = scmp.ge.s32.totalorder %s27, 2
      %s29 = scalar_select %p28, 0, %s27
      %s30 = sadd.s32 1, %s19
      %s31 = scalar_select %p28, %s30, %s19
      %p32 = scmp.ge.s32.totalorder %s31, 2
      %s33 = scalar_select %p32, 0, %s31
      %s34 = sadd.s32 1, %s18
      %s35 = scalar_select %p32, %s34, %s18
      %p36 = scmp.ge.s32.totalorder %s35, 8
      %s37 = scalar_select %p36, 0, %s35
      %s38 = ssub.s32 %s18, %s37
      %p39 = scmp.eq.s32.totalorder %s38, 0
      %s41 = sadd.s32 %s40, 1
      %s42 = scalar_select %p39, %s40, %s41
      %p45 = pneg %p39
      %p46 = scmp.eq.s32.totalorder %s11, 31
      %p47 = por %p45, %p46
      %p48 = scmp.ne.s32.totalorder %s40, %s43
      %p49 = scmp.eq.s32.totalorder %s11, 0
      %p50 = por %p48, %p49
      %p51 = scmp.ne.s32.totalorder %s40, %s43
      %p52 = scmp.eq.s32.totalorder %s16, 31
      %p53 = por %p51, %p52
      %p54 = scmp.ne.s32.totalorder %s43, %s44
      %p55 = scmp.eq.s32.totalorder %s16, 0
      %p56 = por %p54, %p55
      %p57 = scmp.ne.s32.totalorder %s43, %s44
      %p58 = scmp.eq.s32.totalorder %s17, 31
      %p59 = por %p57, %p58
      %p61 = scmp.ne.s32.totalorder %s44, %s60
      %p62 = scmp.eq.s32.totalorder %s17, 0
      %p63 = por %p61, %p62
      %s64 = ssub.s32 %s18, %s37
      %s65 = ssub.s32 %s19, %s33
      %s66 = sor.u32 %s64, %s65
      %s67 = ssub.s32 %s20, %s29
      %s68 = sor.u32 %s66, %s67
      %p69 = scmp.eq.s32.totalorder %s68, 0
      %s71 = sadd.s32 %s70, 1
      %s72 = scalar_select %p69, %s70, %s71
      %p75 = pneg %p69
      %p76 = scmp.eq.s32.totalorder %s11, 31
      %p77 = por %p75, %p76
      %p78 = scmp.ne.s32.totalorder %s70, %s73
      %p79 = scmp.eq.s32.totalorder %s11, 0
      %p80 = por %p78, %p79
      %p81 = scmp.ne.s32.totalorder %s70, %s73
      %p82 = scmp.eq.s32.totalorder %s16, 31
      %p83 = por %p81, %p82
      %p84 = scmp.ne.s32.totalorder %s73, %s74
      %p85 = scmp.eq.s32.totalorder %s16, 0
      %p86 = por %p84, %p85
      %p87 = scmp.ne.s32.totalorder %s73, %s74
      %p88 = scmp.eq.s32.totalorder %s17, 31
      %p89 = por %p87, %p88
      %p91 = scmp.ne.s32.totalorder %s74, %s90
      %p92 = scmp.eq.s32.totalorder %s17, 0
      %p93 = por %p91, %p92
      %s94 = smul.u32 %s19, 2
      %s95 = sadd.s32 %s94, %s20
      %s96 = smul.u32 %s33, 2
      %s97 = sadd.s32 %s96, %s29
      %s98 = ssub.s32 %s95, %s97
      %p99 = scmp.eq.s32.totalorder %s98, 0
      %s101 = sadd.s32 %s100, 1
      %s102 = scalar_select %p99, %s100, %s101
      %p105 = pneg %p99
      %p106 = scmp.eq.s32.totalorder %s11, 31
      %p107 = por %p105, %p106
      %p108 = scmp.ne.s32.totalorder %s100, %s103
      %p109 = scmp.eq.s32.totalorder %s11, 0
      %p110 = por %p108, %p109
      %p111 = scmp.ne.s32.totalorder %s100, %s103
      %p112 = scmp.eq.s32.totalorder %s16, 31
      %p113 = por %p111, %p112
      %p114 = scmp.ne.s32.totalorder %s103, %s104
      %p115 = scmp.eq.s32.totalorder %s16, 0
      %p116 = por %p114, %p115
      %p117 = scmp.ne.s32.totalorder %s103, %s104
      %p118 = scmp.eq.s32.totalorder %s17, 31
      %p119 = por %p117, %p118
      %p121 = scmp.ne.s32.totalorder %s104, %s120
      %p122 = scmp.eq.s32.totalorder %s17, 0
      %p123 = por %p121, %p122
      %s125 = sadd.s32 %s124, 1
      %p128 = scmp.eq.s32.totalorder %s11, 31
      %p129 = scmp.ne.s32.totalorder %s124, %s126
      %p130 = scmp.eq.s32.totalorder %s11, 0
      %p131 = por %p129, %p130
      %p132 = scmp.ne.s32.totalorder %s124, %s126
      %p133 = scmp.eq.s32.totalorder %s16, 31
      %p134 = por %p132, %p133
      %p135 = scmp.ne.s32.totalorder %s126, %s127
      %p136 = scmp.eq.s32.totalorder %s16, 0
      %p137 = por %p135, %p136
      %p138 = scmp.ne.s32.totalorder %s126, %s127
      %p139 = scmp.eq.s32.totalorder %s17, 31
      %p140 = por %p138, %p139
      %p142 = scmp.ne.s32.totalorder %s127, %s141
      %p143 = scmp.eq.s32.totalorder %s17, 0
      %p144 = por %p142, %p143
      %s145 = smul.u32 %s19, 2
      %s146 = sadd.s32 %s145, %s20
      %s147 = smul.u32 %s33, 2
      %s148 = sadd.s32 %s147, %s29
      %s149 = ssub.s32 %s146, %s148
      %p150 = scmp.eq.s32.totalorder %s149, 0
      %s152 = sadd.s32 %s151, 1
      %s153 = scalar_select %p150, %s151, %s152
      %p156 = pneg %p150
      %p157 = scmp.eq.s32.totalorder %s11, 31
      %p158 = por %p156, %p157
      %p159 = scmp.ne.s32.totalorder %s151, %s154
      %p160 = scmp.eq.s32.totalorder %s11, 0
      %p161 = por %p159, %p160
      %p162 = scmp.ne.s32.totalorder %s151, %s154
      %p163 = scmp.eq.s32.totalorder %s16, 31
      %p164 = por %p162, %p163
      %p165 = scmp.ne.s32.totalorder %s154, %s155
      %p166 = scmp.eq.s32.totalorder %s16, 0
      %p167 = por %p165, %p166
      %p168 = scmp.ne.s32.totalorder %s154, %s155
      %p169 = scmp.eq.s32.totalorder %s17, 31
      %p170 = por %p168, %p169
      %p172 = scmp.ne.s32.totalorder %s155, %s171
      %p173 = scmp.eq.s32.totalorder %s17, 0
      %p174 = por %p172, %p173
      %s175 = ssub.s32 %s18, %s37
      %s176 = ssub.s32 %s19, %s33
      %s177 = sor.u32 %s175, %s176
      %s178 = ssub.s32 %s20, %s29
      %s179 = sor.u32 %s177, %s178
      %p180 = scmp.eq.s32.totalorder %s179, 0
      %s182 = sadd.s32 %s181, 1
      %s183 = scalar_select %p180, %s181, %s182
      %p186 = pneg %p180
      %p187 = scmp.eq.s32.totalorder %s11, 31
      %p188 = por %p186, %p187
      %p189 = scmp.ne.s32.totalorder %s181, %s184
      %p190 = scmp.eq.s32.totalorder %s11, 0
      %p191 = por %p189, %p190
      %p192 = scmp.ne.s32.totalorder %s181, %s184
      %p193 = scmp.eq.s32.totalorder %s16, 31
      %p194 = por %p192, %p193
      %p195 = scmp.ne.s32.totalorder %s184, %s185
      %p196 = scmp.eq.s32.totalorder %s16, 0
      %p197 = por %p195, %p196
      %p198 = scmp.ne.s32.totalorder %s184, %s185
      %p199 = scmp.eq.s32.totalorder %s17, 31
      %p200 = por %p198, %p199
      %p202 = scmp.ne.s32.totalorder %s185, %s201
      %p203 = scmp.eq.s32.totalorder %s17, 0
      %p204 = por %p202, %p203
      %p205 = scmp.le.s32.totalorder 1, %s11
      %p206 = scmp.lt.s32.totalorder %s11, 33
      %p207 = pnand %p205, %p206
      %p208 = pneg %p207
      // Predicated region
      $region9: #{deup_cat_forward.1} parent=5 // pred_check
        _
      $region10: #{deup_cat_forward.1} parent=5 // pred_check_branch
        %210 = sbr.rel (%p207) target = $region12
      $region11: #{deup_cat_forward.1} parent=5 // pred_region
        %s211 = ssub.s32 %s11, 1
        // Predicated region
        $region13: #{deup_cat_forward.1} parent=11 // pred_check
          %p212 = pneg %p137
        $region14: #{deup_cat_forward.1} parent=11 // pred_check_branch
          %214 = sbr.rel (%p212) target = $region16
        $region15: #{deup_cat_forward.1} parent=11 // pred_region
          _
        $region16: #{deup_cat_forward.1} parent=11 // pred_fallthru
          _
      $region12: #{deup_cat_forward.1} parent=5 // pred_fallthru
        _
      %p215 = scmp.lt.s32.totalorder %s11, 32
      // Predicated region
      $region17: #{deup_cat_forward.1} parent=5 // pred_check
        %p216 = pneg %p215
      $region18: #{deup_cat_forward.1} parent=5 // pred_check_branch
        %218 = sbr.rel (%p216) target = $region20
      $region19: #{deup_cat_forward.1} parent=5 // pred_region
        // Predicated region
        $region21: #{deup_cat_forward.1} parent=19 // pred_check
          %p219 = pneg %p50
        $region22: #{deup_cat_forward.1} parent=19 // pred_check_branch
          %221 = sbr.rel (%p219) target = $region24
        $region23: #{deup_cat_forward.1} parent=19 // pred_region
          %p222 = scmp.lt.s32.totalorder %s18, 7
          %s223 = scalar_select %p222, %s18, 7
          %s224 = smul.addr %s223, 16
          %s225 = smul.addr %s224, 4
          %s226 = scalar_lea.vmem %s0, %s225
        $region24: #{deup_cat_forward.1} parent=19 // pred_fallthru
          _
        // Predicated region
        $region25: #{deup_cat_forward.1} parent=19 // pred_check
          %p227 = pneg %p80
        $region26: #{deup_cat_forward.1} parent=19 // pred_check_branch
          %229 = sbr.rel (%p227) target = $region28
        $region27: #{deup_cat_forward.1} parent=19 // pred_region
          %s230 = sand.u32 %s70, 1
          %s231 = sand.u32 %s70, 1
          %s232 = smul.addr %s231, 64
          %s233 = scalar_lea.vmem [#allocation2], %s232
          %s234 = smul.addr %s20, 2
          %s235 = smul.addr %s19, 32
          %s236 = sadd.s32 %s234, %s235
          %s237 = smul.addr %s18, 64
          %s238 = sadd.s32 %s236, %s237
          %s239 = smul.addr %s238, 4
          %s240 = scalar_lea.vmem %s1, %s239
          // Predicated region
          $region29: #{deup_cat_forward.1} parent=27 // pred_check
            _
          $region30: #{deup_cat_forward.1} parent=27 // pred_check_branch
            %242 = sbr.rel (0) target = $region32
          $region31: #{deup_cat_forward.1} parent=27 // pred_region
            // Predicated region
            $region33: #{deup_cat_forward.1} parent=31 // pred_check
              _
            $region34: #{deup_cat_forward.1} parent=31 // pred_check_branch
              %244 = sbr.rel target = $region36
            $region35: #{deup_cat_forward.1} parent=31 // pred_region
              // Predicated region
              $region48: #{deup_cat_forward.1} parent=35 // pred_check
                _
              $region49: #{deup_cat_forward.1} parent=35 // pred_check_branch
                %289 = sbr.rel (0) target = $region51
              $region50: #{deup_cat_forward.1} parent=35 // pred_region
                loop: start=0, step=1, limit=1
                $region52: #{deup_cat_forward.1} parent=50 // loop_pre_header
                  _
                $region53: #{deup_cat_forward.1} parent=50 // loop_header
                  %s291 = sphi 0, %s295
                  %p292 = scmp.ge.s32.totalorder %s291, 1
                  %s296 = sphi %s240, %s240
                  %s297 = sphi %s233, %s233
                $region54: #{deup_cat_forward.1} parent=50 // loop_header_branch
                  %294 = sbr.rel (%p292) target = $region58
                $region55: #{deup_cat_forward.1} parent=50 // loop_body
                  _
                $region56: #{deup_cat_forward.1} parent=50 // loop_footer
                  %s295 = sadd.s32 1, %s291
                $region57: #{deup_cat_forward.1} parent=50 // loop_footer_branch
                  %290 = sbr.rel target = $region53
                $region58: #{deup_cat_forward.1} parent=50 // loop_exit
                  _
                loop: start=0, step=1, limit=1
                $region59: #{deup_cat_forward.1} parent=50 // loop_pre_header
                  _
                $region60: #{deup_cat_forward.1} parent=50 // loop_header
                  %s300 = sphi 0, %s304
                  %p301 = scmp.ge.s32.totalorder %s300, 1
                  %s305 = sphi %s240, %s240
                  %s306 = sphi %s233, %s233
                $region61: #{deup_cat_forward.1} parent=50 // loop_header_branch
                  %303 = sbr.rel (%p301) target = $region65
                $region62: #{deup_cat_forward.1} parent=50 // loop_body
                  %v307 = vld [vmem:[%s305] sm:$0xf]
                  %308 = vst [vmem:[%s306] sm:$0xf] %v307
                  %v309 = vld [vmem:[%s305 + $0x4] sm:$0xf]
                  %310 = vst [vmem:[%s306 + $0x4] sm:$0xf] %v309
                  %v311 = vld [vmem:[%s305 + $0x10] sm:$0xf]
                  %312 = vst [vmem:[%s306 + $0x8] sm:$0xf] %v311
                  %v313 = vld [vmem:[%s305 + $0x14] sm:$0xf]
                  %314 = vst [vmem:[%s306 + $0xc] sm:$0xf] %v313
                  %v315 = vld [vmem:[%s305 + $0x20] sm:$0xf]
                  %316 = vst [vmem:[%s306 + $0x10] sm:$0xf] %v315
                  %v317 = vld [vmem:[%s305 + $0x24] sm:$0xf]
                  %318 = vst [vmem:[%s306 + $0x14] sm:$0xf] %v317
                  %v319 = vld [vmem:[%s305 + $0x30] sm:$0xf]
                  %320 = vst [vmem:[%s306 + $0x18] sm:$0xf] %v319
                  %v321 = vld [vmem:[%s305 + $0x34] sm:$0xf]
                  %322 = vst [vmem:[%s306 + $0x1c] sm:$0xf] %v321
                  %v323 = vld [vmem:[%s305 + $0x40] sm:$0xf]
                  %324 = vst [vmem:[%s306 + $0x20] sm:$0xf] %v323
                  %v325 = vld [vmem:[%s305 + $0x44] sm:$0xf]
                  %326 = vst [vmem:[%s306 + $0x24] sm:$0xf] %v325
                  %v327 = vld [vmem:[%s305 + $0x50] sm:$0xf]
                  %328 = vst [vmem:[%s306 + $0x28] sm:$0xf] %v327
                  %v329 = vld [vmem:[%s305 + $0x54] sm:$0xf]
                  %330 = vst [vmem:[%s306 + $0x2c] sm:$0xf] %v329
                  %v331 = vld [vmem:[%s305 + $0x60] sm:$0xf]
                  %332 = vst [vmem:[%s306 + $0x30] sm:$0xf] %v331
                  %v333 = vld [vmem:[%s305 + $0x64] sm:$0xf]
                  %334 = vst [vmem:[%s306 + $0x34] sm:$0xf] %v333
                  %v335 = vld [vmem:[%s305 + $0x70] sm:$0xf]
                  %336 = vst [vmem:[%s306 + $0x38] sm:$0xf] %v335
                  %v337 = vld [vmem:[%s305 + $0x74] sm:$0xf]
                  %338 = vst [vmem:[%s306 + $0x3c] sm:$0xf] %v337
                $region63: #{deup_cat_forward.1} parent=50 // loop_footer
                  %s304 = sadd.s32 1, %s300
                $region64: #{deup_cat_forward.1} parent=50 // loop_footer_branch
                  %299 = sbr.rel target = $region60
                $region65: #{deup_cat_forward.1} parent=50 // loop_exit
                  _
              $region51: #{deup_cat_forward.1} parent=35 // pred_fallthru
                _
            $region36: #{deup_cat_forward.1} parent=31 // pred_fallthru
              _
            // Predicated region
            $region37: #{deup_cat_forward.1} parent=31 // pred_check
              _
            $region38: #{deup_cat_forward.1} parent=31 // pred_check_branch
              %246 = sbr.rel (0) target = $region40
            $region39: #{deup_cat_forward.1} parent=31 // pred_region
              loop: start=0, step=1, limit=1
              $region41: #{deup_cat_forward.1} parent=39 // loop_pre_header
                _
              $region42: #{deup_cat_forward.1} parent=39 // loop_header
                %s249 = sphi 0, %s253
                %p250 = scmp.ge.s32.totalorder %s249, 1
                %s254 = sphi %s240, %s240
                %s255 = sphi %s233, %s233
              $region43: #{deup_cat_forward.1} parent=39 // loop_header_branch
                %252 = sbr.rel (%p250) target = $region47
              $region44: #{deup_cat_forward.1} parent=39 // loop_body
                %v256 = vld [vmem:[%s254] sm:$0xf]
                %257 = vst [vmem:[%s255] sm:$0xf] %v256
                %v258 = vld [vmem:[%s254 + $0x4] sm:$0xf]
                %259 = vst [vmem:[%s255 + $0x4] sm:$0xf] %v258
                %v260 = vld [vmem:[%s254 + $0x10] sm:$0xf]
                %261 = vst [vmem:[%s255 + $0x8] sm:$0xf] %v260
                %v262 = vld [vmem:[%s254 + $0x14] sm:$0xf]
                %263 = vst [vmem:[%s255 + $0xc] sm:$0xf] %v262
                %v264 = vld [vmem:[%s254 + $0x20] sm:$0xf]
                %265 = vst [vmem:[%s255 + $0x10] sm:$0xf] %v264
                %v266 = vld [vmem:[%s254 + $0x24] sm:$0xf]
                %267 = vst [vmem:[%s255 + $0x14] sm:$0xf] %v266
                %v268 = vld [vmem:[%s254 + $0x30] sm:$0xf]
                %269 = vst [vmem:[%s255 + $0x18] sm:$0xf] %v268
                %v270 = vld [vmem:[%s254 + $0x34] sm:$0xf]
                %271 = vst [vmem:[%s255 + $0x1c] sm:$0xf] %v270
                %v272 = vld [vmem:[%s254 + $0x40] sm:$0xf]
                %273 = vst [vmem:[%s255 + $0x20] sm:$0xf] %v272
                %v274 = vld [vmem:[%s254 + $0x44] sm:$0xf]
                %275 = vst [vmem:[%s255 + $0x24] sm:$0xf] %v274
                %v276 = vld [vmem:[%s254 + $0x50] sm:$0xf]
                %277 = vst [vmem:[%s255 + $0x28] sm:$0xf] %v276
                %v278 = vld [vmem:[%s254 + $0x54] sm:$0xf]
                %279 = vst [vmem:[%s255 + $0x2c] sm:$0xf] %v278
                %v280 = vld [vmem:[%s254 + $0x60] sm:$0xf]
                %281 = vst [vmem:[%s255 + $0x30] sm:$0xf] %v280
                %v282 = vld [vmem:[%s254 + $0x64] sm:$0xf]
                %283 = vst [vmem:[%s255 + $0x34] sm:$0xf] %v282
                %v284 = vld [vmem:[%s254 + $0x70] sm:$0xf]
                %285 = vst [vmem:[%s255 + $0x38] sm:$0xf] %v284
                %v286 = vld [vmem:[%s254 + $0x74] sm:$0xf]
                %287 = vst [vmem:[%s255 + $0x3c] sm:$0xf] %v286
              $region45: #{deup_cat_forward.1} parent=39 // loop_footer
                %s253 = sadd.s32 1, %s249
              $region46: #{deup_cat_forward.1} parent=39 // loop_footer_branch
                %248 = sbr.rel target = $region42
              $region47: #{deup_cat_forward.1} parent=39 // loop_exit
                _
            $region40: #{deup_cat_forward.1} parent=31 // pred_fallthru
              _
          $region32: #{deup_cat_forward.1} parent=27 // pred_fallthru
            _
          %339 = vnop
        $region28: #{deup_cat_forward.1} parent=19 // pred_fallthru
          _
        // Predicated region
        $region66: #{deup_cat_forward.1} parent=19 // pred_check
          %p340 = pneg %p110
        $region67: #{deup_cat_forward.1} parent=19 // pred_check_branch
          %342 = sbr.rel (%p340) target = $region69
        $region68: #{deup_cat_forward.1} parent=19 // pred_region
          %s343 = smul.u32 %s19, 2
          %s344 = sadd.s32 %s343, %s20
          %p345 = scmp.lt.s32.totalorder %s344, 3
          %s346 = scalar_select %p345, %s344, 3
          %s347 = smul.addr %s346, 4
          %s348 = smul.addr %s347, 4
          %s349 = scalar_lea.vmem %s2, %s348
          %s350 = smul.u32 %s19, 2
          %s351 = sadd.s32 %s350, %s20
        $region69: #{deup_cat_forward.1} parent=19 // pred_fallthru
          _
        // Predicated region
        $region70: #{deup_cat_forward.1} parent=19 // pred_check
          %p352 = pneg %p161
        $region71: #{deup_cat_forward.1} parent=19 // pred_check_branch
          %354 = sbr.rel (%p352) target = $region73
        $region72: #{deup_cat_forward.1} parent=19 // pred_region
          %s355 = smul.u32 %s19, 2
          %s356 = sadd.s32 %s355, %s20
          %p357 = scmp.lt.s32.totalorder %s356, 3
          %s358 = scalar_select %p357, %s356, 3
          %s359 = scalar_lea.vmem %s4, %s358
          %s360 = smul.u32 %s19, 2
          %s361 = sadd.s32 %s360, %s20
        $region73: #{deup_cat_forward.1} parent=19 // pred_fallthru
          _
      $region20: #{deup_cat_forward.1} parent=5 // pred_fallthru
        _
      %p362 = scmp.le.s32.totalorder 1, %s11
      %p363 = scmp.lt.s32.totalorder %s11, 33
      %p364 = pnand %p362, %p363
      %p365 = pneg %p364
      // Predicated region
      $region74: #{deup_cat_forward.1} parent=5 // pred_check
        _
      $region75: #{deup_cat_forward.1} parent=5 // pred_check_branch
        %367 = sbr.rel (%p364) target = $region77
      $region76: #{deup_cat_forward.1} parent=5 // pred_region
        %s368 = ssub.s32 %s11, 1
        %s369 = sand.u32 %s73, 1
        %s370 = sand.u32 %s73, 1
        %s371 = smul.addr %s370, 64
        %s372 = scalar_lea.vmem [#allocation2], %s371
        // Predicated region
        $region78: #{deup_cat_forward.1} parent=76 // pred_check
          %p373 = pneg %p86
        $region79: #{deup_cat_forward.1} parent=76 // pred_check_branch
          %375 = sbr.rel (%p373) target = $region81
        $region80: #{deup_cat_forward.1} parent=76 // pred_region
          _
        $region81: #{deup_cat_forward.1} parent=76 // pred_fallthru
          _
        %p376 = scmp.lt.s32.totalorder %s21, 7
        %s377 = scalar_select %p376, %s21, 7
        %s378 = smul.addr %s377, 16
        %s379 = smul.addr %s378, 4
        %s380 = scalar_lea.vmem %s0, %s379
        %p381 = pneg %p56
        %p382 = pneg %p53
        %s383 = sand.u32 %s73, 1
        %s384 = sand.u32 %s73, 1
        %s385 = smul.addr %s384, 64
        %s386 = scalar_lea.vmem [#allocation2], %s385
        %p387 = pneg %p86
        %p388 = pneg %p83
        %s389 = smul.u32 %s22, 2
        %s390 = sadd.s32 %s389, %s23
        %p391 = scmp.lt.s32.totalorder %s390, 3
        %s392 = scalar_select %p391, %s390, 3
        %s393 = smul.addr %s392, 4
        %s394 = smul.addr %s393, 4
        %s395 = scalar_lea.vmem %s2, %s394
        %p396 = pneg %p116
        %p397 = pneg %p113
        %p398 = pneg %p137
        %p399 = pneg %p134
        %s400 = smul.u32 %s22, 2
        %s401 = sadd.s32 %s400, %s23
        %p402 = scmp.lt.s32.totalorder %s401, 3
        %s403 = scalar_select %p402, %s401, 3
        %s404 = scalar_lea.vmem %s4, %s403
        %p405 = pneg %p167
        %p406 = pneg %p164
        %p407 = pneg %p197
        %p408 = pneg %p194
        %s409 = sand.u32 %s184, 1
        %s410 = sand.u32 %s184, 1
        %s411 = smul.addr %s410, 64
        %s412 = scalar_lea.vmem [#allocation3], %s411
        %p413 = scmp.lt.s32.totalorder %s21, 7
        %s414 = scalar_select %p413, %s21, 7
        %s415 = smul.addr %s414, 16
        %s416 = smul.addr %s415, 4
        %s417 = scalar_lea.vmem %s0, %s416
        %s418 = smul.u32 %s22, 2
        %s419 = sadd.s32 %s418, %s23
        %p420 = scmp.lt.s32.totalorder %s419, 3
        %s421 = scalar_select %p420, %s419, 3
        %s422 = smul.addr %s421, 4
        %s423 = smul.addr %s422, 4
        %s424 = scalar_lea.vmem %s2, %s423
        %s425 = smul.u32 %s22, 2
        %s426 = sadd.s32 %s425, %s23
        %s427 = smul.u32 %s22, 2
        %s428 = sadd.s32 %s427, %s23
        %p429 = scmp.lt.s32.totalorder %s428, 3
        %s430 = scalar_select %p429, %s428, 3
        %s431 = scalar_lea.vmem %s4, %s430
        %s432 = smul.u32 %s22, 2
        %s433 = sadd.s32 %s432, %s23
        %v435 = vld [vmem:[%s417] sm:$0xf]
        %v436 = vld [vmem:[%s417 + $0x4] sm:$0xf]
        %v437 = vld [vmem:[%s417 + $0x8] sm:$0xf]
        %v438 = vld [vmem:[%s417 + $0xc] sm:$0xf]
        %v439 = vld [vmem:[%s417 + $0x10] sm:$0xf]
        %v440 = vld [vmem:[%s417 + $0x14] sm:$0xf]
        %v441 = vld [vmem:[%s417 + $0x18] sm:$0xf]
        %v442 = vld [vmem:[%s417 + $0x1c] sm:$0xf]
        %v443 = vld [vmem:[%s417 + $0x20] sm:$0xf]
        %v444 = vld [vmem:[%s417 + $0x24] sm:$0xf]
        %v445 = vld [vmem:[%s417 + $0x28] sm:$0xf]
        %v446 = vld [vmem:[%s417 + $0x2c] sm:$0xf]
        %v447 = vld [vmem:[%s417 + $0x30] sm:$0xf]
        %v448 = vld [vmem:[%s417 + $0x34] sm:$0xf]
        %v449 = vld [vmem:[%s417 + $0x38] sm:$0xf]
        %v450 = vld [vmem:[%s417 + $0x3c] sm:$0xf]
        %v451 = vld [vmem:[%s424] sm:$0xf]
        %v452 = vld [vmem:[%s424 + $0x4] sm:$0xf]
        %v453 = vld [vmem:[%s424 + $0x8] sm:$0xf]
        %v454 = vld [vmem:[%s424 + $0xc] sm:$0xf]
        %v455 = vld [vmem:[%s372] sm:$0xf]
        %v456 = vld [vmem:[%s372 + $0x4] sm:$0xf]
        %v457 = vld [vmem:[%s372 + $0x8] sm:$0xf]
        %v458 = vld [vmem:[%s372 + $0xc] sm:$0xf]
        %v459 = vld [vmem:[%s372 + $0x10] sm:$0xf]
        %v460 = vld [vmem:[%s372 + $0x14] sm:$0xf]
        %v461 = vld [vmem:[%s372 + $0x18] sm:$0xf]
        %v462 = vld [vmem:[%s372 + $0x1c] sm:$0xf]
        %v463 = vld [vmem:[%s372 + $0x20] sm:$0xf]
        %v464 = vld [vmem:[%s372 + $0x24] sm:$0xf]
        %v465 = vld [vmem:[%s372 + $0x28] sm:$0xf]
        %v466 = vld [vmem:[%s372 + $0x2c] sm:$0xf]
        %v467 = vld [vmem:[%s372 + $0x30] sm:$0xf]
        %v468 = vld [vmem:[%s372 + $0x34] sm:$0xf]
        %v469 = vld [vmem:[%s372 + $0x38] sm:$0xf]
        %v470 = vld [vmem:[%s372 + $0x3c] sm:$0xf]
        %v471 = vld [vmem:[%s3] sm:$0xf]
        %v472 = vld [vmem:[%s3 + $0x4] sm:$0xf]
        %v473 = vld [vmem:[%s3 + $0x8] sm:$0xf]
        %v474 = vld [vmem:[%s3 + $0xc] sm:$0xf]
        %v475 = vld [vmem:[%s3 + $0x10] sm:$0xf]
        %v476 = vld [vmem:[%s3 + $0x14] sm:$0xf]
        %v477 = vld [vmem:[%s3 + $0x18] sm:$0xf]
        %v478 = vld [vmem:[%s3 + $0x1c] sm:$0xf]
        %v479 = vld [vmem:[%s3 + $0x20] sm:$0xf]
        %v480 = vld [vmem:[%s3 + $0x24] sm:$0xf]
        %v481 = vld [vmem:[%s3 + $0x28] sm:$0xf]
        %v482 = vld [vmem:[%s3 + $0x2c] sm:$0xf]
        %v483 = vld [vmem:[%s3 + $0x30] sm:$0xf]
        %v484 = vld [vmem:[%s3 + $0x34] sm:$0xf]
        %v485 = vld [vmem:[%s3 + $0x38] sm:$0xf]
        %v486 = vld [vmem:[%s3 + $0x3c] sm:$0xf]
        %v503 = vunpack.c.l.b16 %v455
        %v504 = vunpack.c.l.b16 %v456
        %v505 = vunpack.c.l.b16 %v457
        %v506 = vunpack.c.l.b16 %v458
        %v507 = vunpack.c.l.b16 %v459
        %v508 = vunpack.c.l.b16 %v460
        %v509 = vunpack.c.l.b16 %v461
        %v510 = vunpack.c.l.b16 %v462
        %v511 = vunpack.c.l.b16 %v463
        %v512 = vunpack.c.l.b16 %v464
        %v513 = vunpack.c.l.b16 %v465
        %v514 = vunpack.c.l.b16 %v466
        %v515 = vunpack.c.l.b16 %v467
        %v516 = vunpack.c.l.b16 %v468
        %v517 = vunpack.c.l.b16 %v469
        %v518 = vunpack.c.l.b16 %v470
        %v519 = vpack.c.b16 %v504, %v503
        %v520 = vpack.c.b16 %v506, %v505
        %v521 = vpack.c.b16 %v508, %v507
        %v522 = vpack.c.b16 %v510, %v509
        %v523 = vpack.c.b16 %v512, %v511
        %v524 = vpack.c.b16 %v514, %v513
        %v525 = vpack.c.b16 %v516, %v515
        %v526 = vpack.c.b16 %v518, %v517
        %v551 = vunpack.c.l.b16 %v471
        %v552 = vunpack.c.l.b16 %v472
        %v553 = vunpack.c.l.b16 %v473
        %v554 = vunpack.c.l.b16 %v474
        %v555 = vunpack.c.l.b16 %v475
        %v556 = vunpack.c.l.b16 %v476
        %v557 = vunpack.c.l.b16 %v477
        %v558 = vunpack.c.l.b16 %v478
        %v559 = vunpack.c.l.b16 %v479
        %v560 = vunpack.c.l.b16 %v480
        %v561 = vunpack.c.l.b16 %v481
        %v562 = vunpack.c.l.b16 %v482
        %v563 = vunpack.c.l.b16 %v483
        %v564 = vunpack.c.l.b16 %v484
        %v565 = vunpack.c.l.b16 %v485
        %v566 = vunpack.c.l.b16 %v486
        %v567 = vpack.c.b16 %v552, %v551
        %v568 = vpack.c.b16 %v554, %v553
        %v569 = vpack.c.b16 %v556, %v555
        %v570 = vpack.c.b16 %v558, %v557
        %v571 = vpack.c.b16 %v560, %v559
        %v572 = vpack.c.b16 %v562, %v561
        %v573 = vpack.c.b16 %v564, %v563
        %v574 = vpack.c.b16 %v566, %v565
        %583 = vmatprep.subr.bf16.mxu0 0
        %584 = vmatpush1.bf16.msra.mxu0 %v567
        %585 = vmatprep.subr.bf16.mxu0 0
        %586 = vmatpush1.bf16.msra.mxu0 %v568
        %587 = vmatprep.subr.bf16.mxu0 0
        %588 = vmatpush1.bf16.msra.mxu0 %v569
        %589 = vmatprep.subr.bf16.mxu0 0
        %590 = vmatpush1.bf16.msra.mxu0 %v570
        %591 = vmatprep.subr.bf16.mxu0 0
        %592 = vmatpush1.bf16.msra.mxu0 %v571
        %593 = vmatprep.subr.bf16.mxu0 0
        %594 = vmatpush1.bf16.msra.mxu0 %v572
        %595 = vmatprep.subr.bf16.mxu0 0
        %596 = vmatpush1.bf16.msra.mxu0 %v573
        %597 = vmatprep.subr.bf16.mxu0 0
        %598 = vmatpush1.bf16.msra.mxu0 %v574
        %599 = vmatprep.subr.bf16.mxu0 0
        %600 = vmatpush1.bf16.msra.mxu0 0
        %601 = vmatprep.subr.bf16.mxu0 0
        %602 = vmatpush1.bf16.msra.mxu0 0
        %603 = vmatprep.subr.bf16.mxu0 0
        %604 = vmatpush1.bf16.msra.mxu0 0
        %605 = vmatprep.subr.bf16.mxu0 0
        %606 = vmatpush1.bf16.msra.mxu0 0
        %607 = vmatprep.subr.bf16.mxu0 0
        %608 = vmatpush1.bf16.msra.mxu0 0
        %609 = vmatprep.subr.bf16.mxu0 0
        %610 = vmatpush1.bf16.msra.mxu0 0
        %611 = vmatprep.subr.bf16.mxu0 0
        %612 = vmatpush1.bf16.msra.mxu0 0
        %613 = vmatprep.subr.bf16.mxu0 0
        %614 = vmatpush1.bf16.msra.mxu0 0
        %615 = vmatprep.mubr.bf16.mxu0 0
        %616 = vmatmul.mubr.bf16.gmra.mrb[0].mxu0 %v519
        %v617 = vpop.f32.mrb[0].mxu0
        %v618 = vadd.f32 0.0, %v617
        %v619 = vpop.f32.mrb[0].mxu0
        %v620 = vpop.f32.mrb[0].mxu0
        %v621 = vadd.f32 0.0, %v620
        %v622 = vpop.f32.mrb[0].mxu0
        %623 = vmatprep.mubr.bf16.mxu0 0
        %624 = vmatmul.mubr.bf16.gmra.mrb[0].mxu0 %v520
        %v625 = vpop.f32.mrb[0].mxu0
        %v626 = vadd.f32 0.0, %v625
        %v627 = vpop.f32.mrb[0].mxu0
        %v628 = vpop.f32.mrb[0].mxu0
        %v629 = vadd.f32 0.0, %v628
        %v630 = vpop.f32.mrb[0].mxu0
        %631 = vmatprep.mubr.bf16.mxu0 0
        %632 = vmatmul.mubr.bf16.gmra.mrb[0].mxu0 %v521
        %v633 = vpop.f32.mrb[0].mxu0
        %v634 = vadd.f32 0.0, %v633
        %v635 = vpop.f32.mrb[0].mxu0
        %v636 = vpop.f32.mrb[0].mxu0
        %v637 = vadd.f32 0.0, %v636
        %v638 = vpop.f32.mrb[0].mxu0
        %639 = vmatprep.mubr.bf16.mxu0 0
        %640 = vmatmul.mubr.bf16.gmra.mrb[0].mxu0 %v522
        %v641 = vpop.f32.mrb[0].mxu0
        %v642 = vadd.f32 0.0, %v641
        %v643 = vpop.f32.mrb[0].mxu0
        %v644 = vpop.f32.mrb[0].mxu0
        %v645 = vadd.f32 0.0, %v644
        %v646 = vpop.f32.mrb[0].mxu0
        %647 = vmatprep.mubr.bf16.mxu0 0
        %648 = vmatmul.mubr.bf16.gmra.mrb[0].mxu0 %v523
        %v649 = vpop.f32.mrb[0].mxu0
        %v650 = vadd.f32 0.0, %v649
        %v651 = vpop.f32.mrb[0].mxu0
        %v652 = vpop.f32.mrb[0].mxu0
        %v653 = vadd.f32 0.0, %v652
        %v654 = vpop.f32.mrb[0].mxu0
        %655 = vmatprep.mubr.bf16.mxu0 0
        %656 = vmatmul.mubr.bf16.gmra.mrb[0].mxu0 %v524
        %v657 = vpop.f32.mrb[0].mxu0
        %v658 = vadd.f32 0.0, %v657
        %v659 = vpop.f32.mrb[0].mxu0
        %v660 = vpop.f32.mrb[0].mxu0
        %v661 = vadd.f32 0.0, %v660
        %v662 = vpop.f32.mrb[0].mxu0
        %663 = vmatprep.mubr.bf16.mxu0 0
        %664 = vmatmul.mubr.bf16.gmra.mrb[0].mxu0 %v525
        %v665 = vpop.f32.mrb[0].mxu0
        %v666 = vadd.f32 0.0, %v665
        %v667 = vpop.f32.mrb[0].mxu0
        %v668 = vpop.f32.mrb[0].mxu0
        %v669 = vadd.f32 0.0, %v668
        %v670 = vpop.f32.mrb[0].mxu0
        %671 = vmatprep.mubr.bf16.mxu0 0
        %672 = vmatmul.mubr.bf16.gmra.mrb[0].mxu0 %v526
        %v673 = vpop.f32.mrb[0].mxu0
        %v674 = vadd.f32 0.0, %v673
        %v675 = vpop.f32.mrb[0].mxu0
        %v676 = vpop.f32.mrb[0].mxu0
        %v677 = vadd.f32 0.0, %v676
        %v678 = vpop.f32.mrb[0].mxu0
        %679 = vdwg.mxu0
        %v696 = vunpack.c.l.b16 %v435
        %v697 = vunpack.c.l.b16 %v436
        %v698 = vunpack.c.l.b16 %v437
        %v699 = vunpack.c.l.b16 %v438
        %v700 = vunpack.c.l.b16 %v439
        %v701 = vunpack.c.l.b16 %v440
        %v702 = vunpack.c.l.b16 %v441
        %v703 = vunpack.c.l.b16 %v442
        %v704 = vunpack.c.l.b16 %v443
        %v705 = vunpack.c.l.b16 %v444
        %v706 = vunpack.c.l.b16 %v445
        %v707 = vunpack.c.l.b16 %v446
        %v708 = vunpack.c.l.b16 %v447
        %v709 = vunpack.c.l.b16 %v448
        %v710 = vunpack.c.l.b16 %v449
        %v711 = vunpack.c.l.b16 %v450
        %v712 = vpack.c.b16 %v697, %v696
        %v713 = vpack.c.b16 %v699, %v698
        %v714 = vpack.c.b16 %v701, %v700
        %v715 = vpack.c.b16 %v703, %v702
        %v716 = vpack.c.b16 %v705, %v704
        %v717 = vpack.c.b16 %v707, %v706
        %v718 = vpack.c.b16 %v709, %v708
        %v719 = vpack.c.b16 %v711, %v710
        %v724 = vunpack.c.l.b16 %v451
        %v725 = vunpack.c.l.b16 %v452
        %v726 = vunpack.c.l.b16 %v453
        %v727 = vunpack.c.l.b16 %v454
        %v728 = vpack.c.b16 %v725, %v724
        %v729 = vpack.c.b16 %v727, %v726
        %vm732 = vcmask 261120
        %v734 = vsel %vm732, %v712, 0
        %v737 = vsel %vm732, %v713, 0
        %v740 = vsel %vm732, %v714, 0
        %v743 = vsel %vm732, %v715, 0
        %v746 = vsel %vm732, %v716, 0
        %v749 = vsel %vm732, %v717, 0
        %v752 = vsel %vm732, %v718, 0
        %v755 = vsel %vm732, %v719, 0
        %757 = vmatprep.subr.bf16.mxu0 0
        %758 = vmatpush1.bf16.msra.mxu0 %v728
        %759 = vmatprep.subr.bf16.mxu0 0
        %760 = vmatpush1.bf16.msra.mxu0 %v729
        %761 = vmatprep.subr.bf16.mxu0 0
        %762 = vmatpush1.bf16.msra.mxu0 0
        %763 = vmatprep.subr.bf16.mxu0 0
        %764 = vmatpush1.bf16.msra.mxu0 0
        %765 = vmatprep.subr.bf16.mxu0 0
        %766 = vmatpush1.bf16.msra.mxu0 0
        %767 = vmatprep.subr.bf16.mxu0 0
        %768 = vmatpush1.bf16.msra.mxu0 0
        %769 = vmatprep.subr.bf16.mxu0 0
        %770 = vmatpush1.bf16.msra.mxu0 0
        %771 = vmatprep.subr.bf16.mxu0 0
        %772 = vmatpush1.bf16.msra.mxu0 0
        %773 = vmatprep.subr.bf16.mxu0 0
        %774 = vmatpush1.bf16.msra.mxu0 0
        %775 = vmatprep.subr.bf16.mxu0 0
        %776 = vmatpush1.bf16.msra.mxu0 0
        %777 = vmatprep.subr.bf16.mxu0 0
        %778 = vmatpush1.bf16.msra.mxu0 0
        %779 = vmatprep.subr.bf16.mxu0 0
        %780 = vmatpush1.bf16.msra.mxu0 0
        %781 = vmatprep.subr.bf16.mxu0 0
        %782 = vmatpush1.bf16.msra.mxu0 0
        %783 = vmatprep.subr.bf16.mxu0 0
        %784 = vmatpush1.bf16.msra.mxu0 0
        %785 = vmatprep.subr.bf16.mxu0 0
        %786 = vmatpush1.bf16.msra.mxu0 0
        %787 = vmatprep.subr.bf16.mxu0 0
        %788 = vmatpush1.bf16.msra.mxu0 0
        %789 = vmatprep.mubr.bf16.mxu0 0
        %790 = vmatmul.mubr.bf16.gmra.mrb[0].mxu0 %v734
        %v791 = vpop.f32.mrb[0].mxu0
        %v792 = vadd.f32 %v618, %v791
        %v793 = vpop.f32.mrb[0].mxu0
        %v794 = vpop.f32.mrb[0].mxu0
        %v795 = vadd.f32 %v621, %v794
        %v796 = vpop.f32.mrb[0].mxu0
        %797 = vmatprep.mubr.bf16.mxu0 0
        %798 = vmatmul.mubr.bf16.gmra.mrb[0].mxu0 %v737
        %v799 = vpop.f32.mrb[0].mxu0
        %v800 = vadd.f32 %v626, %v799
        %v801 = vpop.f32.mrb[0].mxu0
        %v802 = vpop.f32.mrb[0].mxu0
        %v803 = vadd.f32 %v629, %v802
        %v804 = vpop.f32.mrb[0].mxu0
        %805 = vmatprep.mubr.bf16.mxu0 0
        %806 = vmatmul.mubr.bf16.gmra.mrb[0].mxu0 %v740
        %v807 = vpop.f32.mrb[0].mxu0
        %v808 = vadd.f32 %v634, %v807
        %v809 = vpop.f32.mrb[0].mxu0
        %v810 = vpop.f32.mrb[0].mxu0
        %v811 = vadd.f32 %v637, %v810
        %v812 = vpop.f32.mrb[0].mxu0
        %813 = vmatprep.mubr.bf16.mxu0 0
        %814 = vmatmul.mubr.bf16.gmra.mrb[0].mxu0 %v743
        %v815 = vpop.f32.mrb[0].mxu0
        %v816 = vadd.f32 %v642, %v815
        %v817 = vpop.f32.mrb[0].mxu0
        %v818 = vpop.f32.mrb[0].mxu0
        %v819 = vadd.f32 %v645, %v818
        %v820 = vpop.f32.mrb[0].mxu0
        %821 = vmatprep.mubr.bf16.mxu0 0
        %822 = vmatmul.mubr.bf16.gmra.mrb[0].mxu0 %v746
        %v823 = vpop.f32.mrb[0].mxu0
        %v824 = vadd.f32 %v650, %v823
        %v825 = vpop.f32.mrb[0].mxu0
        %v826 = vpop.f32.mrb[0].mxu0
        %v827 = vadd.f32 %v653, %v826
        %v828 = vpop.f32.mrb[0].mxu0
        %829 = vmatprep.mubr.bf16.mxu0 0
        %830 = vmatmul.mubr.bf16.gmra.mrb[0].mxu0 %v749
        %v831 = vpop.f32.mrb[0].mxu0
        %v832 = vadd.f32 %v658, %v831
        %v833 = vpop.f32.mrb[0].mxu0
        %v834 = vpop.f32.mrb[0].mxu0
        %v835 = vadd.f32 %v661, %v834
        %v836 = vpop.f32.mrb[0].mxu0
        %837 = vmatprep.mubr.bf16.mxu0 0
        %838 = vmatmul.mubr.bf16.gmra.mrb[0].mxu0 %v752
        %v839 = vpop.f32.mrb[0].mxu0
        %v840 = vadd.f32 %v666, %v839
        %v841 = vpop.f32.mrb[0].mxu0
        %v842 = vpop.f32.mrb[0].mxu0
        %v843 = vadd.f32 %v669, %v842
        %v844 = vpop.f32.mrb[0].mxu0
        %845 = vmatprep.mubr.bf16.mxu0 0
        %846 = vmatmul.mubr.bf16.gmra.mrb[0].mxu0 %v755
        %v847 = vpop.f32.mrb[0].mxu0
        %v848 = vadd.f32 %v674, %v847
        %v849 = vpop.f32.mrb[0].mxu0
        %v850 = vpop.f32.mrb[0].mxu0
        %v851 = vadd.f32 %v677, %v850
        %v852 = vpop.f32.mrb[0].mxu0
        %853 = vdwg.mxu0
        %v854 = vld [vmem:[%s431] sm:$0x1]
        %v856 = vlaneseq
        %v857 = vshrl.u32 %v856, 7
        %v858 = vsub.s32 0, %v857
        %v859 = vrot.slane %v854, %v858
        %v861 = vadd.f32 %v792, %v859
        %v862 = vadd.f32 %v795, %v859
        %v863 = vadd.f32 %v800, %v859
        %v864 = vadd.f32 %v803, %v859
        %v865 = vadd.f32 %v808, %v859
        %v866 = vadd.f32 %v811, %v859
        %v867 = vadd.f32 %v816, %v859
        %v868 = vadd.f32 %v819, %v859
        %v869 = vadd.f32 %v824, %v859
        %v870 = vadd.f32 %v827, %v859
        %v871 = vadd.f32 %v832, %v859
        %v872 = vadd.f32 %v835, %v859
        %v873 = vadd.f32 %v840, %v859
        %v874 = vadd.f32 %v843, %v859
        %v875 = vadd.f32 %v848, %v859
        %v876 = vadd.f32 %v851, %v859
        %v877 = vpack.c.bf16 %v862, %v861
        %v878 = vpack.c.bf16 %v864, %v863
        %v879 = vpack.c.bf16 %v866, %v865
        %v880 = vpack.c.bf16 %v868, %v867
        %v881 = vpack.c.bf16 %v870, %v869
        %v882 = vpack.c.bf16 %v872, %v871
        %v883 = vpack.c.bf16 %v874, %v873
        %v884 = vpack.c.bf16 %v876, %v875
        %v893 = vunpack.c.l.b16 %v877
        %v894 = vunpack.c.h.b16 %v877
        %v895 = vunpack.c.l.b16 %v878
        %v896 = vunpack.c.h.b16 %v878
        %v897 = vunpack.c.l.b16 %v879
        %v898 = vunpack.c.h.b16 %v879
        %v899 = vunpack.c.l.b16 %v880
        %v900 = vunpack.c.h.b16 %v880
        %v901 = vunpack.c.l.b16 %v881
        %v902 = vunpack.c.h.b16 %v881
        %v903 = vunpack.c.l.b16 %v882
        %v904 = vunpack.c.h.b16 %v882
        %v905 = vunpack.c.l.b16 %v883
        %v906 = vunpack.c.h.b16 %v883
        %v907 = vunpack.c.l.b16 %v884
        %v908 = vunpack.c.h.b16 %v884
        %v909 = vpack.c.b16 %v893, %v893
        %v910 = vpack.c.b16 %v894, %v894
        %v911 = vpack.c.b16 %v895, %v895
        %v912 = vpack.c.b16 %v896, %v896
        %v913 = vpack.c.b16 %v897, %v897
        %v914 = vpack.c.b16 %v898, %v898
        %v915 = vpack.c.b16 %v899, %v899
        %v916 = vpack.c.b16 %v900, %v900
        %v917 = vpack.c.b16 %v901, %v901
        %v918 = vpack.c.b16 %v902, %v902
        %v919 = vpack.c.b16 %v903, %v903
        %v920 = vpack.c.b16 %v904, %v904
        %v921 = vpack.c.b16 %v905, %v905
        %v922 = vpack.c.b16 %v906, %v906
        %v923 = vpack.c.b16 %v907, %v907
        %v924 = vpack.c.b16 %v908, %v908
        %941 = vst [vmem:[%s412] sm:$0xf] %v909
        %942 = vst [vmem:[%s412 + $0x4] sm:$0xf] %v910
        %943 = vst [vmem:[%s412 + $0x8] sm:$0xf] %v911
        %944 = vst [vmem:[%s412 + $0xc] sm:$0xf] %v912
        %945 = vst [vmem:[%s412 + $0x10] sm:$0xf] %v913
        %946 = vst [vmem:[%s412 + $0x14] sm:$0xf] %v914
        %947 = vst [vmem:[%s412 + $0x18] sm:$0xf] %v915
        %948 = vst [vmem:[%s412 + $0x1c] sm:$0xf] %v916
        %949 = vst [vmem:[%s412 + $0x20] sm:$0xf] %v917
        %950 = vst [vmem:[%s412 + $0x24] sm:$0xf] %v918
        %951 = vst [vmem:[%s412 + $0x28] sm:$0xf] %v919
        %952 = vst [vmem:[%s412 + $0x2c] sm:$0xf] %v920
        %953 = vst [vmem:[%s412 + $0x30] sm:$0xf] %v921
        %954 = vst [vmem:[%s412 + $0x34] sm:$0xf] %v922
        %955 = vst [vmem:[%s412 + $0x38] sm:$0xf] %v923
        %956 = vst [vmem:[%s412 + $0x3c] sm:$0xf] %v924
        %s957 = sand.u32 %s184, 1
        %s958 = sand.u32 %s184, 1
        %s959 = smul.addr %s958, 64
        %s960 = scalar_lea.vmem [#allocation3], %s959
        // Predicated region
        $region82: #{deup_cat_forward.1} parent=76 // pred_check
          %p961 = pneg %p194
        $region83: #{deup_cat_forward.1} parent=76 // pred_check_branch
          %963 = sbr.rel (%p961) target = $region85
        $region84: #{deup_cat_forward.1} parent=76 // pred_region
          %s964 = smul.addr %s23, 2
          %s965 = smul.addr %s22, 32
          %s966 = sadd.s32 %s964, %s965
          %s967 = smul.addr %s21, 64
          %s968 = sadd.s32 %s966, %s967
          %s969 = smul.addr %s968, 4
          %s970 = scalar_lea.vmem %s5, %s969
          // Predicated region
          $region86: #{deup_cat_forward.1} parent=84 // pred_check
            _
          $region87: #{deup_cat_forward.1} parent=84 // pred_check_branch
            %972 = sbr.rel (0) target = $region89
          $region88: #{deup_cat_forward.1} parent=84 // pred_region
            // Predicated region
            $region90: #{deup_cat_forward.1} parent=88 // pred_check
              _
            $region91: #{deup_cat_forward.1} parent=88 // pred_check_branch
              %974 = sbr.rel target = $region93
            $region92: #{deup_cat_forward.1} parent=88 // pred_region
              // Predicated region
              $region105: #{deup_cat_forward.1} parent=92 // pred_check
                _
              $region106: #{deup_cat_forward.1} parent=92 // pred_check_branch
                %1019 = sbr.rel (0) target = $region108
              $region107: #{deup_cat_forward.1} parent=92 // pred_region
                loop: start=0, step=1, limit=1
                $region109: #{deup_cat_forward.1} parent=107 // loop_pre_header
                  _
                $region110: #{deup_cat_forward.1} parent=107 // loop_header
                  %s1021 = sphi 0, %s1025
                  %p1022 = scmp.ge.s32.totalorder %s1021, 1
                  %s1026 = sphi %s960, %s960
                  %s1027 = sphi %s970, %s970
                $region111: #{deup_cat_forward.1} parent=107 // loop_header_branch
                  %1024 = sbr.rel (%p1022) target = $region115
                $region112: #{deup_cat_forward.1} parent=107 // loop_body
                  _
                $region113: #{deup_cat_forward.1} parent=107 // loop_footer
                  %s1025 = sadd.s32 1, %s1021
                $region114: #{deup_cat_forward.1} parent=107 // loop_footer_branch
                  %1020 = sbr.rel target = $region110
                $region115: #{deup_cat_forward.1} parent=107 // loop_exit
                  _
                loop: start=0, step=1, limit=1
                $region116: #{deup_cat_forward.1} parent=107 // loop_pre_header
                  _
                $region117: #{deup_cat_forward.1} parent=107 // loop_header
                  %s1030 = sphi 0, %s1034
                  %p1031 = scmp.ge.s32.totalorder %s1030, 1
                  %s1035 = sphi %s960, %s960
                  %s1036 = sphi %s970, %s970
                $region118: #{deup_cat_forward.1} parent=107 // loop_header_branch
                  %1033 = sbr.rel (%p1031) target = $region122
                $region119: #{deup_cat_forward.1} parent=107 // loop_body
                  %v1037 = vld [vmem:[%s1035] sm:$0xf]
                  %1038 = vst [vmem:[%s1036] sm:$0xf] %v1037
                  %v1039 = vld [vmem:[%s1035 + $0x4] sm:$0xf]
                  %1040 = vst [vmem:[%s1036 + $0x4] sm:$0xf] %v1039
                  %v1041 = vld [vmem:[%s1035 + $0x8] sm:$0xf]
                  %1042 = vst [vmem:[%s1036 + $0x10] sm:$0xf] %v1041
                  %v1043 = vld [vmem:[%s1035 + $0xc] sm:$0xf]
                  %1044 = vst [vmem:[%s1036 + $0x14] sm:$0xf] %v1043
                  %v1045 = vld [vmem:[%s1035 + $0x10] sm:$0xf]
                  %1046 = vst [vmem:[%s1036 + $0x20] sm:$0xf] %v1045
                  %v1047 = vld [vmem:[%s1035 + $0x14] sm:$0xf]
                  %1048 = vst [vmem:[%s1036 + $0x24] sm:$0xf] %v1047
                  %v1049 = vld [vmem:[%s1035 + $0x18] sm:$0xf]
                  %1050 = vst [vmem:[%s1036 + $0x30] sm:$0xf] %v1049
                  %v1051 = vld [vmem:[%s1035 + $0x1c] sm:$0xf]
                  %1052 = vst [vmem:[%s1036 + $0x34] sm:$0xf] %v1051
                  %v1053 = vld [vmem:[%s1035 + $0x20] sm:$0xf]
                  %1054 = vst [vmem:[%s1036 + $0x40] sm:$0xf] %v1053
                  %v1055 = vld [vmem:[%s1035 + $0x24] sm:$0xf]
                  %1056 = vst [vmem:[%s1036 + $0x44] sm:$0xf] %v1055
                  %v1057 = vld [vmem:[%s1035 + $0x28] sm:$0xf]
                  %1058 = vst [vmem:[%s1036 + $0x50] sm:$0xf] %v1057
                  %v1059 = vld [vmem:[%s1035 + $0x2c] sm:$0xf]
                  %1060 = vst [vmem:[%s1036 + $0x54] sm:$0xf] %v1059
                  %v1061 = vld [vmem:[%s1035 + $0x30] sm:$0xf]
                  %1062 = vst [vmem:[%s1036 + $0x60] sm:$0xf] %v1061
                  %v1063 = vld [vmem:[%s1035 + $0x34] sm:$0xf]
                  %1064 = vst [vmem:[%s1036 + $0x64] sm:$0xf] %v1063
                  %v1065 = vld [vmem:[%s1035 + $0x38] sm:$0xf]
                  %1066 = vst [vmem:[%s1036 + $0x70] sm:$0xf] %v1065
                  %v1067 = vld [vmem:[%s1035 + $0x3c] sm:$0xf]
                  %1068 = vst [vmem:[%s1036 + $0x74] sm:$0xf] %v1067
                $region120: #{deup_cat_forward.1} parent=107 // loop_footer
                  %s1034 = sadd.s32 1, %s1030
                $region121: #{deup_cat_forward.1} parent=107 // loop_footer_branch
                  %1029 = sbr.rel target = $region117
                $region122: #{deup_cat_forward.1} parent=107 // loop_exit
                  _
              $region108: #{deup_cat_forward.1} parent=92 // pred_fallthru
                _
            $region93: #{deup_cat_forward.1} parent=88 // pred_fallthru
              _
            // Predicated region
            $region94: #{deup_cat_forward.1} parent=88 // pred_check
              _
            $region95: #{deup_cat_forward.1} parent=88 // pred_check_branch
              %976 = sbr.rel (0) target = $region97
            $region96: #{deup_cat_forward.1} parent=88 // pred_region
              loop: start=0, step=1, limit=1
              $region98: #{deup_cat_forward.1} parent=96 // loop_pre_header
                _
              $region99: #{deup_cat_forward.1} parent=96 // loop_header
                %s979 = sphi 0, %s983
                %p980 = scmp.ge.s32.totalorder %s979, 1
                %s984 = sphi %s960, %s960
                %s985 = sphi %s970, %s970
              $region100: #{deup_cat_forward.1} parent=96 // loop_header_branch
                %982 = sbr.rel (%p980) target = $region104
              $region101: #{deup_cat_forward.1} parent=96 // loop_body
                %v986 = vld [vmem:[%s984] sm:$0xf]
                %987 = vst [vmem:[%s985] sm:$0xf] %v986
                %v988 = vld [vmem:[%s984 + $0x4] sm:$0xf]
                %989 = vst [vmem:[%s985 + $0x4] sm:$0xf] %v988
                %v990 = vld [vmem:[%s984 + $0x8] sm:$0xf]
                %991 = vst [vmem:[%s985 + $0x10] sm:$0xf] %v990
                %v992 = vld [vmem:[%s984 + $0xc] sm:$0xf]
                %993 = vst [vmem:[%s985 + $0x14] sm:$0xf] %v992
                %v994 = vld [vmem:[%s984 + $0x10] sm:$0xf]
                %995 = vst [vmem:[%s985 + $0x20] sm:$0xf] %v994
                %v996 = vld [vmem:[%s984 + $0x14] sm:$0xf]
                %997 = vst [vmem:[%s985 + $0x24] sm:$0xf] %v996
                %v998 = vld [vmem:[%s984 + $0x18] sm:$0xf]
                %999 = vst [vmem:[%s985 + $0x30] sm:$0xf] %v998
                %v1000 = vld [vmem:[%s984 + $0x1c] sm:$0xf]
                %1001 = vst [vmem:[%s985 + $0x34] sm:$0xf] %v1000
                %v1002 = vld [vmem:[%s984 + $0x20] sm:$0xf]
                %1003 = vst [vmem:[%s985 + $0x40] sm:$0xf] %v1002
                %v1004 = vld [vmem:[%s984 + $0x24] sm:$0xf]
                %1005 = vst [vmem:[%s985 + $0x44] sm:$0xf] %v1004
                %v1006 = vld [vmem:[%s984 + $0x28] sm:$0xf]
                %1007 = vst [vmem:[%s985 + $0x50] sm:$0xf] %v1006
                %v1008 = vld [vmem:[%s984 + $0x2c] sm:$0xf]
                %1009 = vst [vmem:[%s985 + $0x54] sm:$0xf] %v1008
                %v1010 = vld [vmem:[%s984 + $0x30] sm:$0xf]
                %1011 = vst [vmem:[%s985 + $0x60] sm:$0xf] %v1010
                %v1012 = vld [vmem:[%s984 + $0x34] sm:$0xf]
                %1013 = vst [vmem:[%s985 + $0x64] sm:$0xf] %v1012
                %v1014 = vld [vmem:[%s984 + $0x38] sm:$0xf]
                %1015 = vst [vmem:[%s985 + $0x70] sm:$0xf] %v1014
                %v1016 = vld [vmem:[%s984 + $0x3c] sm:$0xf]
                %1017 = vst [vmem:[%s985 + $0x74] sm:$0xf] %v1016
              $region102: #{deup_cat_forward.1} parent=96 // loop_footer
                %s983 = sadd.s32 1, %s979
              $region103: #{deup_cat_forward.1} parent=96 // loop_footer_branch
                %978 = sbr.rel target = $region99
              $region104: #{deup_cat_forward.1} parent=96 // loop_exit
                _
            $region97: #{deup_cat_forward.1} parent=88 // pred_fallthru
              _
          $region89: #{deup_cat_forward.1} parent=84 // pred_fallthru
            _
          %1069 = vnop
        $region85: #{deup_cat_forward.1} parent=76 // pred_fallthru
          _
      $region77: #{deup_cat_forward.1} parent=5 // pred_fallthru
        _
      %p1070 = scmp.le.s32.totalorder 2, %s11
      // Predicated region
      $region123: #{deup_cat_forward.1} parent=5 // pred_check
        %p1071 = pneg %p1070
      $region124: #{deup_cat_forward.1} parent=5 // pred_check_branch
        %1073 = sbr.rel (%p1071) target = $region126
      $region125: #{deup_cat_forward.1} parent=5 // pred_region
        %s1074 = ssub.s32 %s11, 2
        // Predicated region
        $region127: #{deup_cat_forward.1} parent=125 // pred_check
          %p1075 = pneg %p200
        $region128: #{deup_cat_forward.1} parent=125 // pred_check_branch
          %1077 = sbr.rel (%p1075) target = $region130
        $region129: #{deup_cat_forward.1} parent=125 // pred_region
          %s1078 = sand.u32 %s185, 1
          %s1079 = sand.u32 %s185, 1
          %s1080 = smul.addr %s1079, 64
          %s1081 = scalar_lea.vmem [#allocation3], %s1080
        $region130: #{deup_cat_forward.1} parent=125 // pred_fallthru
          _
      $region126: #{deup_cat_forward.1} parent=5 // pred_fallthru
        _
    $region6: #{deup_cat_forward.1} parent=1 // loop_footer
      %s15 = sadd.s32 1, %s11
    $region7: #{deup_cat_forward.1} parent=1 // loop_footer_branch
      %10 = sbr.rel target = $region3
    $region8: #{deup_cat_forward.1} parent=1 // loop_exit
      _

</llo_original>
